<compile_context>
chip_gen: v5e
topology: v5e:2x2
jax: 0.10.0
libtpu: 0.0.40
codegen_flags: <defaults>
</compile_context>

<pallas_src>
import jax
import jax.numpy as jnp
from jax.experimental import pallas as pl
from jax.experimental.pallas import tpu as pltpu


def _drop_path_kernel(scale_ref, x_ref, o_ref):
    # scale_ref: (bt, 1) per-sample scale (mask / keep_prob), already in x.dtype.
    # x_ref / o_ref: (bt, nt) tile. Pure broadcast multiply -> VPU + vld/vst only.
    o_ref[...] = x_ref[...] * scale_ref[...]


def _pick_nt(N, B, itemsize, target_bytes):
    """Largest lane-dense (multiple-of-128) divisor of N within the tile budget."""
    if N % 128 != 0:
        return N                      # full trailing dim -> still a legal block
    min_bt = 8 if (B % 8 == 0) else B
    budget_elems = max(128, target_bytes // (itemsize * max(1, min_bt)))
    k = N // 128
    max_mult = max(1, min(k, budget_elems // 128))
    for m in range(max_mult, 0, -1):
        if k % m == 0:
            return m * 128
    return 128


def _pick_bt(B, nt, itemsize, target_bytes):
    """Rows per block: multiple of 8 dividing B when possible, sized to the budget."""
    if B % 8 != 0:
        return B                      # full batch dim -> legal block
    max_rows = max(8, target_bytes // max(1, nt * itemsize))
    kb = B // 8
    max_mult = max(1, min(kb, max_rows // 8))
    for m in range(max_mult, 0, -1):
        if kb % m == 0:
            return 8 * m
    return 8


def drop_path_pallas(x, key, drop_prob=0.0, training=False, *, target_tile_bytes=4 << 20):
    """JAX/Pallas equivalent of drop_path(x, drop_prob, training)."""
    if drop_prob == 0.0 or not training:
        return x

    keep_prob = 1.0 - float(drop_prob)
    B = x.shape[0]
    N = 1
    for d in x.shape[1:]:
        N *= int(d)

    # Per-sample scale hoisted out of the kernel: floor(keep_prob + U[0,1)) / keep_prob.
    u = jax.random.uniform(key, (B,), dtype=jnp.float32)
    mask = jnp.floor(jnp.float32(keep_prob) + u)
    scale = (mask * (1.0 / jnp.float32(keep_prob))).astype(x.dtype).reshape(B, 1)

    x_flat = x.reshape(B, N)
    itemsize = x.dtype.itemsize

    nt = _pick_nt(N, B, itemsize, target_tile_bytes)
    bt = _pick_bt(B, nt, itemsize, target_tile_bytes)
    grid = (B // bt, N // nt)

    block_bytes = bt * nt * itemsize
    # in + out, double-buffered, plus slack; keep under v7x's 64 MiB physical VMEM.
    vmem_limit = int(min(max(5 * block_bytes + (1 << 20), 16 << 20), 64 << 20))

    y_flat = pl.pallas_call(
        _drop_path_kernel,
        out_shape=jax.ShapeDtypeStruct((B, N), x.dtype),
        grid=grid,
        in_specs=[
            pl.BlockSpec((bt, 1), lambda i, j: (i, 0)),   # per-sample scale
            pl.BlockSpec((bt, nt), lambda i, j: (i, j)),  # activation tile
        ],
        out_specs=pl.BlockSpec((bt, nt), lambda i, j: (i, j)),
        compiler_params=pltpu.CompilerParams(
            dimension_semantics=("parallel", "parallel"),
            vmem_limit_bytes=vmem_limit,
        ),
    )(scale, x_flat)

    return y_flat.reshape(x.shape)


class DropPath:
    """Thin module-like wrapper mirroring the PyTorch nn.Module."""

    def __init__(self, drop_prob=None):
        self.drop_prob = 0.0 if drop_prob is None else float(drop_prob)
        self.training = True

    def __call__(self, x, key):
        return drop_path_pallas(x, key, self.drop_prob, self.training)


if __name__ == "__main__":
    import numpy as np

    key = jax.random.PRNGKey(0)
    kx, kd = jax.random.split(key)

    B, L, D = 2, 8, 32
    x = jax.random.normal(kx, (B, L, D), dtype=jnp.float32)

    # --- training path (exercises the Pallas kernel) ---
    mod = DropPath(drop_prob=0.25)
    mod.training = True
    y = jax.block_until_ready(mod(x, kd))

    keep_prob = 1.0 - 0.25
    y_np = np.asarray(y)
    x_np = np.asarray(x)
    for b in range(B):
        is_zero = np.allclose(y_np[b], 0.0)
        is_scaled = np.allclose(y_np[b], x_np[b] / keep_prob, rtol=1e-5, atol=1e-5)
        assert is_zero or is_scaled, f"sample {b}: not a valid drop-path output"

    # --- eval path (identity) ---
    mod.training = False
    y_eval = jax.block_until_ready(mod(x, kd))
    assert np.allclose(np.asarray(y_eval), x_np)

    print("KERNEL_OK")
</pallas_src>

<mosaic_0001>
module attributes {stable_mosaic.version = 11 : i64} {
  func.func @_drop_path_kernel(%arg0: i32, %arg1: i32, %arg2: memref<2x1xf32, #tpu.memory_space<vmem>>, %arg3: memref<2x256xf32, #tpu.memory_space<vmem>>, %arg4: memref<2x256xf32, #tpu.memory_space<vmem>>) attributes {dimension_semantics = [#tpu.dimension_semantics<parallel>, #tpu.dimension_semantics<parallel>], iteration_bounds = array<i64: 1, 1>, scalar_prefetch = 0 : i64, scratch_operands = 0 : i64, tpu.core_type = #tpu.core_type<tc>, window_params = [{transform_indices = @transform_0, window_bounds = array<i64: 2, 1>}, {transform_indices = @transform_1, window_bounds = array<i64: 2, 256>}, {transform_indices = @transform_2, window_bounds = array<i64: 2, 256>}]} {
    %c0 = arith.constant 0 : index
    %c0_0 = arith.constant 0 : index
    %0 = vector.load %arg3[%c0, %c0_0] : memref<2x256xf32, #tpu.memory_space<vmem>>, vector<2x256xf32>
    %c0_1 = arith.constant 0 : index
    %c0_2 = arith.constant 0 : index
    %1 = vector.load %arg2[%c0_1, %c0_2] : memref<2x1xf32, #tpu.memory_space<vmem>>, vector<2x1xf32>
    %2 = vector.broadcast %1 : vector<2x1xf32> to vector<2x256xf32>
    %3 = arith.mulf %0, %2 : vector<2x256xf32>
    %c0_3 = arith.constant 0 : index
    %c0_4 = arith.constant 0 : index
    %4 = vector.load %arg4[%c0_3, %c0_4] : memref<2x256xf32, #tpu.memory_space<vmem>>, vector<2x256xf32>
    tpu.vector_store %arg4[%c0_3, %c0_4], %3 {strides = array<i32>} : memref<2x256xf32, #tpu.memory_space<vmem>>, vector<2x256xf32>,
    return
  }
  func.func @transform_0(%arg0: i32, %arg1: i32) -> (i32, i32) {
    %c0_i32 = arith.constant 0 : i32
    %c0_i32_0 = arith.constant 0 : i32
    return %arg0, %c0_i32 : i32, i32
  }
  func.func @transform_1(%arg0: i32, %arg1: i32) -> (i32, i32) {
    %c0_i32 = arith.constant 0 : i32
    return %arg0, %arg1 : i32, i32
  }
  func.func @transform_2(%arg0: i32, %arg1: i32) -> (i32, i32) {
    %c0_i32 = arith.constant 0 : i32
    return %arg0, %arg1 : i32, i32
  }
}

</mosaic_0001>

<llo_original>
// kernel: tpu_custom_call.1
$region0: #{tpu_custom_call.1}
  #allocation0 [shape = 'u32[]', space=smem, size = 0x4, offset = 0x4, fixed_abs, tag = 'smem constant byte address 0x4 - core index']
  #allocation1 [shape = 'u32[72,128]{1,0:T(1,128)}', space=vmem, size = 0x9000, scoped, tag = 'internal scratch']
  %s0 = inlined_call_operand.vmem [shape: f32[2,1], index: 0, kind: input, shape index: {}]
  %s1 = inlined_call_operand.hbm [shape: f32[2,256], index: 1, kind: input, shape index: {}]
  %s2 = inlined_call_operand.hbm [shape: f32[2,256], index: 2, kind: output, shape index: {}]
  %s3 = sld [smem:[#allocation0]]
  $region22: #{tpu_custom_call.1} parent=0
    _
  %s5 = ssub.s32 1, %s3
  %s6 = scalar_select 0, %s5, %s3
  $region1: #{tpu_custom_call.1} parent=0
    #allocation2 [shape = 'u8[2048]{0}', space=vmem, size = 0x800, scoped, tag = 'input window, operand 1, single buffered']
    #allocation3 [shape = 's32[1]{0}', space=sflag, size = 0x4, scoped, tag = 'scoped memory for tpu_custom_call.1']
    #allocation4 [shape = 's32[1]{0}', space=sflag, size = 0x4, scoped, tag = 'scoped memory for tpu_custom_call.1']
    #allocation5 [shape = 'u8[2048]{0}', space=vmem, size = 0x800, scoped, tag = 'output window, operand 0, single buffered']
    %7 = vsyncpa [#allocation3], 0
    %8 = vsyncpa [#allocation4], 0
    // Predicated region
    $region2: #{tpu_custom_call.1} parent=1 // pred_check
      _
    $region3: #{tpu_custom_call.1} parent=1 // pred_check_branch
      %10 = sbr.rel (0) target = $region5
    $region4: #{tpu_custom_call.1} parent=1 // pred_region
      _
    $region5: #{tpu_custom_call.1} parent=1 // pred_fallthru
      _
    // Predicated region
    $region6: #{tpu_custom_call.1} parent=1 // pred_check
      _
    $region7: #{tpu_custom_call.1} parent=1 // pred_check_branch
      %12 = sbr.rel (0) target = $region9
    $region8: #{tpu_custom_call.1} parent=1 // pred_region
      %14 = vsyncadd [#allocation3], 0
      %s16 = sshll.u32 %s1, 4
      %s17 = int_to_ptr.hbm [resolvable:$true] %s16
      %s18 = sshll.u32 [#allocation2], 4
      %s19 = int_to_ptr.vmem [resolvable:$true] %s18
      %21 = dma.hbm_to_vmem [thread:$0]  %s17, 64, %s19, [#allocation3]
    $region9: #{tpu_custom_call.1} parent=1 // pred_fallthru
      _
    // Predicated region
    $region10: #{tpu_custom_call.1} parent=1 // pred_check
      _
    $region11: #{tpu_custom_call.1} parent=1 // pred_check_branch
      %23 = sbr.rel (0) target = $region13
    $region12: #{tpu_custom_call.1} parent=1 // pred_region
      %25 = dma.done [#allocation3], 64
    $region13: #{tpu_custom_call.1} parent=1 // pred_fallthru
      _
    %v26 = vld [vmem:[#allocation2] sm:$0xf]
    %v27 = vld [vmem:[%s0] sm:$0x3]
    %29 = vset.pattern.permute.xlu0 0
    %30 = vperm.xlu0 %29, %v27
    %v31 = vpop.permute.xlu0 %30
    %v33 = vunpack.c.l.s4 269488144
    %v34 = vunpack.c.0.s8 %v33
    %v35 = vperm.slane %v31, %v34
    %v37 = vmul.f32 %v26, %v35
    %38 = vst [vmem:[#allocation5] sm:$0xf] %v37
    // Predicated region
    $region14: #{tpu_custom_call.1} parent=1 // pred_check
      _
    $region15: #{tpu_custom_call.1} parent=1 // pred_check_branch
      %40 = sbr.rel (0) target = $region17
    $region16: #{tpu_custom_call.1} parent=1 // pred_region
      %42 = vsyncadd [#allocation4], 0
      %s44 = sshll.u32 [#allocation5], 4
      %s45 = int_to_ptr.vmem [resolvable:$true] %s44
      %s46 = sshll.u32 %s2, 4
      %s47 = int_to_ptr.hbm [resolvable:$true] %s46
      %49 = dma.vmem_to_hbm [thread:$0]  %s45, 64, %s47, [#allocation4]
    $region17: #{tpu_custom_call.1} parent=1 // pred_fallthru
      _
    // Predicated region
    $region18: #{tpu_custom_call.1} parent=1 // pred_check
      _
    $region19: #{tpu_custom_call.1} parent=1 // pred_check_branch
      %51 = sbr.rel (0) target = $region21
    $region20: #{tpu_custom_call.1} parent=1 // pred_region
      %53 = dma.done [#allocation4], 64
    $region21: #{tpu_custom_call.1} parent=1 // pred_fallthru
      _
    %54 = vsyncpa [#allocation3], 1
    %55 = vsyncpa [#allocation4], 1

</llo_original>
